<compile_context>
chip_gen: v7x
topology: tpu7x:2x2x1
jax: 0.10.0
libtpu: 0.0.40
codegen_flags: <defaults>
</compile_context>

<pallas_src>
import functools

import jax
import jax.numpy as jnp
import numpy as np
from jax.experimental import pallas as pl
from jax.experimental.pallas import tpu as pltpu


# ----------------------------- Pallas kernel --------------------------------
def _conv_bn_mish_kernel(x_ref, w_ref, shift_ref, o_ref, *, N, C, K, WP, L_PAD):
    # x_ref:     (N, C, L_IN)    bf16  zero-padded, spatially flattened images
    # w_ref:     (OC, K*K*C)     bf16  BN-scale-folded weights, tap-major rows
    # shift_ref: (OC, 1)         f32   folded BN shift = beta - mean*scale
    # o_ref:     (N, OC, L_PAD)  f32   lane-dense output (incl. pad columns)
    cols = []
    for n in range(N):                       # static, N small
        taps = []
        for kh in range(K):
            for kw in range(K):
                off = kh * WP + kw           # static lane offset of this tap
                taps.append(x_ref[n, :, off:off + L_PAD])        # (C, L_PAD)
        cols.append(jnp.concatenate(taps, axis=0))               # (K*K*C, L_PAD)
    rhs = jnp.concatenate(cols, axis=1)                          # (K*K*C, N*L_PAD)

    # One MXU push with contraction K*K*C instead of K*K pushes with contraction C.
    acc = jnp.dot(w_ref[...], rhs, preferred_element_type=jnp.float32)  # (OC, N*L_PAD)
    y = acc + shift_ref[...]                                     # folded BN shift

    # Mish: y * tanh(softplus(y)); tanh(sp(y)) = e(e+2)/(e(e+2)+2), e = exp(y).
    e = jnp.exp(jnp.minimum(y, 20.0))
    num = e * (e + 2.0)
    t = num * pl.reciprocal(num + 2.0, approx=True)
    mish = y * jnp.where(y > 20.0, 1.0, t)

    for n in range(N):
        o_ref[n] = mish[:, n * L_PAD:(n + 1) * L_PAD].astype(o_ref.dtype)


# ------------------------------- Wrapper -------------------------------------
def conv_bn_mish(x, weight, gamma, beta, running_mean, running_var,
                 *, stride=1, eps=1e-5):
    """x: (N, C, H, W) f32 NCHW; weight: (OC, C, K, K) PyTorch layout."""
    n, c, h, w = x.shape
    oc, cin, k, k2 = weight.shape
    assert cin == c and k == k2
    pad = (k - 1) // 2
    hp, wp = h + 2 * pad, w + 2 * pad
    oh1, ow1 = hp - k + 1, wp - k + 1          # stride-1 output dims

    # Fold BN (eval mode) into the conv weight; keep only the shift for the kernel.
    scale = gamma / jnp.sqrt(running_var + eps)                     # (OC,)
    w_fold = weight * scale[:, None, None, None]                    # (OC,C,K,K)
    shift = (beta - running_mean * scale).reshape(oc, 1).astype(jnp.float32)

    # Weight rows match the RHS row order (kh*K + kw)*C + c.
    w2d = jnp.transpose(w_fold, (0, 2, 3, 1)).reshape(oc, k * k * c)
    w2d = w2d.astype(jnp.bfloat16)

    # Lane-dense output columns (multiple of 128); input padded so that every
    # shifted slice [off : off + L_PAD] (off_max = (K-1)*(WP+1)) stays in-bounds.
    l_out = oh1 * wp
    l_pad = ((l_out + 127) // 128) * 128
    off_max = (k - 1) * (wp + 1)
    l_in = ((off_max + l_pad + 127) // 128) * 128

    xp = jnp.pad(x, ((0, 0), (0, 0), (pad, pad), (pad, pad)))
    xflat = xp.reshape(n, c, hp * wp).astype(jnp.bfloat16)
    xflat = jnp.pad(xflat, ((0, 0), (0, 0), (0, l_in - hp * wp)))

    kernel = functools.partial(_conv_bn_mish_kernel,
                               N=n, C=c, K=k, WP=wp, L_PAD=l_pad)

    out = pl.pallas_call(
        kernel,
        out_shape=jax.ShapeDtypeStruct((n, oc, l_pad), jnp.float32),
        grid_spec=pltpu.PrefetchScalarGridSpec(
            num_scalar_prefetch=0,
            grid=(1,),
            in_specs=[
                pl.BlockSpec((n, c, l_in), lambda i: (0, 0, 0)),
                pl.BlockSpec((oc, k * k * c), lambda i: (0, 0)),
                pl.BlockSpec((oc, 1), lambda i: (0, 0)),
            ],
            out_specs=pl.BlockSpec((n, oc, l_pad), lambda i: (0, 0, 0)),
        ),
        compiler_params=pltpu.CompilerParams(
            dimension_semantics=("arbitrary",)),
    )(xflat, w2d, shift)

    # (N, OC, L_PAD) -> (N, OC, OH1, WP) -> drop pad columns -> NCHW. No transpose.
    out = out[:, :, :l_out].reshape(n, oc, oh1, wp)[:, :, :, :ow1]
    if stride > 1:
        out = out[:, :, ::stride, ::stride]
    return out


# ------------------------------ Reference ------------------------------------
def _reference(x, weight, gamma, beta, running_mean, running_var,
               *, stride=1, eps=1e-5):
    k = weight.shape[-1]
    pad = (k - 1) // 2
    y = jax.lax.conv_general_dilated(
        x, weight, (stride, stride), [(pad, pad), (pad, pad)],
        dimension_numbers=("NCHW", "OIHW", "NCHW"))
    scale = gamma / jnp.sqrt(running_var + eps)
    y = y * scale.reshape(1, -1, 1, 1) + \
        (beta - running_mean * scale).reshape(1, -1, 1, 1)
    sp = jnp.where(y > 20.0, y, jnp.log1p(jnp.exp(jnp.minimum(y, 20.0))))
    return y * jnp.tanh(sp)


# --------------------------------- Main ---------------------------------------
if __name__ == "__main__":
    # Module config: Conv_Bn_Activation(in_channels=4, out_channels=8,
    #                kernel_size=3, stride=1, activation='mish', bn=True, bias=False)
    N, C, H, W = 2, 4, 16, 16
    OC, K, STRIDE = 8, 3, 1

    key = jax.random.PRNGKey(0)
    k_x, k_w, k_g, k_b, k_m, k_v = jax.random.split(key, 6)

    x = jax.random.normal(k_x, (N, C, H, W), dtype=jnp.float32)
    weight = jax.random.normal(k_w, (OC, C, K, K), dtype=jnp.float32) * 0.1
    gamma = jax.random.normal(k_g, (OC,), dtype=jnp.float32) * 0.1 + 1.0
    beta = jax.random.normal(k_b, (OC,), dtype=jnp.float32) * 0.1
    running_mean = jax.random.normal(k_m, (OC,), dtype=jnp.float32) * 0.1
    running_var = jnp.abs(jax.random.normal(k_v, (OC,), dtype=jnp.float32)) * 0.5 + 0.5

    out = conv_bn_mish(x, weight, gamma, beta, running_mean, running_var,
                       stride=STRIDE)
    out = jax.block_until_ready(out)

    ref = _reference(x, weight, gamma, beta, running_mean, running_var,
                     stride=STRIDE)
    ref = jax.block_until_ready(ref)

    assert out.shape == (N, OC, H, W), out.shape
    # bf16 matmul operands + approximate reciprocal in Mish -> looser tolerance.
    np.testing.assert_allclose(np.asarray(out), np.asarray(ref),
                               rtol=2e-2, atol=2e-2)
    print("KERNEL_OK")
</pallas_src>

<mosaic_0001>
module attributes {stable_mosaic.version = 11 : i64} {
  func.func @_conv_bn_mish_kernel(%arg0: i32, %arg1: memref<2x4x512xbf16, #tpu.memory_space<vmem>>, %arg2: memref<8x36xbf16, #tpu.memory_space<vmem>>, %arg3: memref<8x1xf32, #tpu.memory_space<vmem>>, %arg4: memref<2x8x384xf32, #tpu.memory_space<vmem>>) attributes {dimension_semantics = [#tpu.dimension_semantics<arbitrary>], iteration_bounds = array<i64: 1>, scalar_prefetch = 0 : i64, scratch_operands = 0 : i64, tpu.core_type = #tpu.core_type<tc>, window_params = [{pipeline_mode = #tpu.pipeline_mode<synchronous>, transform_indices = @transform_0, window_bounds = array<i64: 2, 4, 512>}, {pipeline_mode = #tpu.pipeline_mode<synchronous>, transform_indices = @transform_1, window_bounds = array<i64: 8, 36>}, {pipeline_mode = #tpu.pipeline_mode<synchronous>, transform_indices = @transform_2, window_bounds = array<i64: 8, 1>}, {pipeline_mode = #tpu.pipeline_mode<synchronous>, transform_indices = @transform_3, window_bounds = array<i64: 2, 8, 384>}]} {
    %c0 = arith.constant 0 : index
    %c0_0 = arith.constant 0 : index
    %c0_1 = arith.constant 0 : index
    %0 = vector.load %arg1[%c0, %c0_0, %c0_1] : memref<2x4x512xbf16, #tpu.memory_space<vmem>>, vector<1x4x384xbf16>
    %1 = vector.shape_cast %0 : vector<1x4x384xbf16> to vector<4x384xbf16>
    %c0_2 = arith.constant 0 : index
    %c0_3 = arith.constant 0 : index
    %c1 = arith.constant 1 : index
    %2 = vector.load %arg1[%c0_2, %c0_3, %c1] : memref<2x4x512xbf16, #tpu.memory_space<vmem>>, vector<1x4x384xbf16>
    %3 = vector.shape_cast %2 : vector<1x4x384xbf16> to vector<4x384xbf16>
    %c0_4 = arith.constant 0 : index
    %c0_5 = arith.constant 0 : index
    %c2 = arith.constant 2 : index
    %4 = vector.load %arg1[%c0_4, %c0_5, %c2] : memref<2x4x512xbf16, #tpu.memory_space<vmem>>, vector<1x4x384xbf16>
    %5 = vector.shape_cast %4 : vector<1x4x384xbf16> to vector<4x384xbf16>
    %c0_6 = arith.constant 0 : index
    %c0_7 = arith.constant 0 : index
    %c18 = arith.constant 18 : index
    %6 = vector.load %arg1[%c0_6, %c0_7, %c18] : memref<2x4x512xbf16, #tpu.memory_space<vmem>>, vector<1x4x384xbf16>
    %7 = vector.shape_cast %6 : vector<1x4x384xbf16> to vector<4x384xbf16>
    %c0_8 = arith.constant 0 : index
    %c0_9 = arith.constant 0 : index
    %c19 = arith.constant 19 : index
    %8 = vector.load %arg1[%c0_8, %c0_9, %c19] : memref<2x4x512xbf16, #tpu.memory_space<vmem>>, vector<1x4x384xbf16>
    %9 = vector.shape_cast %8 : vector<1x4x384xbf16> to vector<4x384xbf16>
    %c0_10 = arith.constant 0 : index
    %c0_11 = arith.constant 0 : index
    %c20 = arith.constant 20 : index
    %10 = vector.load %arg1[%c0_10, %c0_11, %c20] : memref<2x4x512xbf16, #tpu.memory_space<vmem>>, vector<1x4x384xbf16>
    %11 = vector.shape_cast %10 : vector<1x4x384xbf16> to vector<4x384xbf16>
    %c0_12 = arith.constant 0 : index
    %c0_13 = arith.constant 0 : index
    %c36 = arith.constant 36 : index
    %12 = vector.load %arg1[%c0_12, %c0_13, %c36] : memref<2x4x512xbf16, #tpu.memory_space<vmem>>, vector<1x4x384xbf16>
    %13 = vector.shape_cast %12 : vector<1x4x384xbf16> to vector<4x384xbf16>
    %c0_14 = arith.constant 0 : index
    %c0_15 = arith.constant 0 : index
    %c37 = arith.constant 37 : index
    %14 = vector.load %arg1[%c0_14, %c0_15, %c37] : memref<2x4x512xbf16, #tpu.memory_space<vmem>>, vector<1x4x384xbf16>
    %15 = vector.shape_cast %14 : vector<1x4x384xbf16> to vector<4x384xbf16>
    %c0_16 = arith.constant 0 : index
    %c0_17 = arith.constant 0 : index
    %c38 = arith.constant 38 : index
    %16 = vector.load %arg1[%c0_16, %c0_17, %c38] : memref<2x4x512xbf16, #tpu.memory_space<vmem>>, vector<1x4x384xbf16>
    %17 = vector.shape_cast %16 : vector<1x4x384xbf16> to vector<4x384xbf16>
    %18 = tpu.concatenate %1, %3, %5, %7, %9, %11, %13, %15, %17 in 0 : vector<4x384xbf16>, vector<4x384xbf16>, vector<4x384xbf16>, vector<4x384xbf16>, vector<4x384xbf16>, vector<4x384xbf16>, vector<4x384xbf16>, vector<4x384xbf16>, vector<4x384xbf16> -> vector<36x384xbf16>
    %c1_18 = arith.constant 1 : index
    %c0_19 = arith.constant 0 : index
    %c0_20 = arith.constant 0 : index
    %19 = vector.load %arg1[%c1_18, %c0_19, %c0_20] : memref<2x4x512xbf16, #tpu.memory_space<vmem>>, vector<1x4x384xbf16>
    %20 = vector.shape_cast %19 : vector<1x4x384xbf16> to vector<4x384xbf16>
    %c1_21 = arith.constant 1 : index
    %c0_22 = arith.constant 0 : index
    %c1_23 = arith.constant 1 : index
    %21 = vector.load %arg1[%c1_21, %c0_22, %c1_23] : memref<2x4x512xbf16, #tpu.memory_space<vmem>>, vector<1x4x384xbf16>
    %22 = vector.shape_cast %21 : vector<1x4x384xbf16> to vector<4x384xbf16>
    %c1_24 = arith.constant 1 : index
    %c0_25 = arith.constant 0 : index
    %c2_26 = arith.constant 2 : index
    %23 = vector.load %arg1[%c1_24, %c0_25, %c2_26] : memref<2x4x512xbf16, #tpu.memory_space<vmem>>, vector<1x4x384xbf16>
    %24 = vector.shape_cast %23 : vector<1x4x384xbf16> to vector<4x384xbf16>
    %c1_27 = arith.constant 1 : index
    %c0_28 = arith.constant 0 : index
    %c18_29 = arith.constant 18 : index
    %25 = vector.load %arg1[%c1_27, %c0_28, %c18_29] : memref<2x4x512xbf16, #tpu.memory_space<vmem>>, vector<1x4x384xbf16>
    %26 = vector.shape_cast %25 : vector<1x4x384xbf16> to vector<4x384xbf16>
    %c1_30 = arith.constant 1 : index
    %c0_31 = arith.constant 0 : index
    %c19_32 = arith.constant 19 : index
    %27 = vector.load %arg1[%c1_30, %c0_31, %c19_32] : memref<2x4x512xbf16, #tpu.memory_space<vmem>>, vector<1x4x384xbf16>
    %28 = vector.shape_cast %27 : vector<1x4x384xbf16> to vector<4x384xbf16>
    %c1_33 = arith.constant 1 : index
    %c0_34 = arith.constant 0 : index
    %c20_35 = arith.constant 20 : index
    %29 = vector.load %arg1[%c1_33, %c0_34, %c20_35] : memref<2x4x512xbf16, #tpu.memory_space<vmem>>, vector<1x4x384xbf16>
    %30 = vector.shape_cast %29 : vector<1x4x384xbf16> to vector<4x384xbf16>
    %c1_36 = arith.constant 1 : index
    %c0_37 = arith.constant 0 : index
    %c36_38 = arith.constant 36 : index
    %31 = vector.load %arg1[%c1_36, %c0_37, %c36_38] : memref<2x4x512xbf16, #tpu.memory_space<vmem>>, vector<1x4x384xbf16>
    %32 = vector.shape_cast %31 : vector<1x4x384xbf16> to vector<4x384xbf16>
    %c1_39 = arith.constant 1 : index
    %c0_40 = arith.constant 0 : index
    %c37_41 = arith.constant 37 : index
    %33 = vector.load %arg1[%c1_39, %c0_40, %c37_41] : memref<2x4x512xbf16, #tpu.memory_space<vmem>>, vector<1x4x384xbf16>
    %34 = vector.shape_cast %33 : vector<1x4x384xbf16> to vector<4x384xbf16>
    %c1_42 = arith.constant 1 : index
    %c0_43 = arith.constant 0 : index
    %c38_44 = arith.constant 38 : index
    %35 = vector.load %arg1[%c1_42, %c0_43, %c38_44] : memref<2x4x512xbf16, #tpu.memory_space<vmem>>, vector<1x4x384xbf16>
    %36 = vector.shape_cast %35 : vector<1x4x384xbf16> to vector<4x384xbf16>
    %37 = tpu.concatenate %20, %22, %24, %26, %28, %30, %32, %34, %36 in 0 : vector<4x384xbf16>, vector<4x384xbf16>, vector<4x384xbf16>, vector<4x384xbf16>, vector<4x384xbf16>, vector<4x384xbf16>, vector<4x384xbf16>, vector<4x384xbf16>, vector<4x384xbf16> -> vector<36x384xbf16>
    %38 = tpu.concatenate %18, %37 in 1 : vector<36x384xbf16>, vector<36x384xbf16> -> vector<36x768xbf16>
    %c0_45 = arith.constant 0 : index
    %c0_46 = arith.constant 0 : index
    %39 = vector.load %arg2[%c0_45, %c0_46] : memref<8x36xbf16, #tpu.memory_space<vmem>>, vector<8x36xbf16>
    %cst = arith.constant dense<0.000000e+00> : vector<8x768xf32>
    %40 = tpu.matmul %39, %38, %cst {dimension_numbers = #tpu.dot_dimension_numbers<[1], [0], [0], [1], [0, 0, 1, 1], [], []>} : vector<8x36xbf16>, vector<36x768xbf16>, vector<8x768xf32> -> vector<8x768xf32>
    %c0_47 = arith.constant 0 : index
    %c0_48 = arith.constant 0 : index
    %41 = vector.load %arg3[%c0_47, %c0_48] : memref<8x1xf32, #tpu.memory_space<vmem>>, vector<8x1xf32>
    %42 = vector.broadcast %41 : vector<8x1xf32> to vector<8x768xf32>
    %43 = arith.addf %40, %42 : vector<8x768xf32>
    %cst_49 = arith.constant 2.000000e+01 : f32
    %44 = vector.broadcast %cst_49 : f32 to vector<8x768xf32>
    %45 = arith.minimumf %43, %44 : vector<8x768xf32>
    %46 = math.exp %45 : vector<8x768xf32>
    %cst_50 = arith.constant 2.000000e+00 : f32
    %47 = vector.broadcast %cst_50 : f32 to vector<8x768xf32>
    %48 = arith.addf %46, %47 : vector<8x768xf32>
    %49 = arith.mulf %46, %48 : vector<8x768xf32>
    %cst_51 = arith.constant 2.000000e+00 : f32
    %50 = vector.broadcast %cst_51 : f32 to vector<8x768xf32>
    %51 = arith.addf %49, %50 : vector<8x768xf32>
    %52 = tpu.reciprocal %51 {approx = true} : vector<8x768xf32> -> vector<8x768xf32>
    %53 = arith.mulf %49, %52 : vector<8x768xf32>
    %cst_52 = arith.constant 2.000000e+01 : f32
    %54 = vector.broadcast %cst_52 : f32 to vector<8x768xf32>
    %55 = arith.cmpf ogt, %43, %54 : vector<8x768xf32>
    %cst_53 = arith.constant 1.000000e+00 : f32
    %56 = vector.broadcast %cst_53 : f32 to vector<8x768xf32>
    %57 = arith.select %55, %56, %53 : vector<8x768xi1>, vector<8x768xf32>
    %58 = arith.mulf %43, %57 : vector<8x768xf32>
    %59 = vector.extract_strided_slice %58 {offsets = [0, 0], sizes = [8, 384], strides = [1, 1]} : vector<8x768xf32> to vector<8x384xf32>
    %c0_54 = arith.constant 0 : index
    %c0_55 = arith.constant 0 : index
    %c0_56 = arith.constant 0 : index
    %60 = vector.load %arg4[%c0_54, %c0_55, %c0_56] : memref<2x8x384xf32, #tpu.memory_space<vmem>>, vector<1x8x384xf32>
    %61 = vector.shape_cast %60 : vector<1x8x384xf32> to vector<8x384xf32>
    %62 = vector.shape_cast %59 : vector<8x384xf32> to vector<1x8x384xf32>
    tpu.vector_store %arg4[%c0_54, %c0_55, %c0_56], %62 {strides = array<i32>} : memref<2x8x384xf32, #tpu.memory_space<vmem>>, vector<1x8x384xf32>,
    %63 = vector.extract_strided_slice %58 {offsets = [0, 384], sizes = [8, 384], strides = [1, 1]} : vector<8x768xf32> to vector<8x384xf32>
    %c1_57 = arith.constant 1 : index
    %c0_58 = arith.constant 0 : index
    %c0_59 = arith.constant 0 : index
    %64 = vector.load %arg4[%c1_57, %c0_58, %c0_59] : memref<2x8x384xf32, #tpu.memory_space<vmem>>, vector<1x8x384xf32>
    %65 = vector.shape_cast %64 : vector<1x8x384xf32> to vector<8x384xf32>
    %66 = vector.shape_cast %63 : vector<8x384xf32> to vector<1x8x384xf32>
    tpu.vector_store %arg4[%c1_57, %c0_58, %c0_59], %66 {strides = array<i32>} : memref<2x8x384xf32, #tpu.memory_space<vmem>>, vector<1x8x384xf32>,
    return
  }
  func.func @transform_0(%arg0: i32) -> (i32, i32, i32) {
    %c0_i32 = arith.constant 0 : i32
    %c0_i32_0 = arith.constant 0 : i32
    %c0_i32_1 = arith.constant 0 : i32
    %c0_i32_2 = arith.constant 0 : i32
    return %c0_i32, %c0_i32_0, %c0_i32_1 : i32, i32, i32
  }
  func.func @transform_1(%arg0: i32) -> (i32, i32) {
    %c0_i32 = arith.constant 0 : i32
    %c0_i32_0 = arith.constant 0 : i32
    %c0_i32_1 = arith.constant 0 : i32
    return %c0_i32, %c0_i32_0 : i32, i32
  }
  func.func @transform_2(%arg0: i32) -> (i32, i32) {
    %c0_i32 = arith.constant 0 : i32
    %c0_i32_0 = arith.constant 0 : i32
    %c0_i32_1 = arith.constant 0 : i32
    return %c0_i32, %c0_i32_0 : i32, i32
  }
  func.func @transform_3(%arg0: i32) -> (i32, i32, i32) {
    %c0_i32 = arith.constant 0 : i32
    %c0_i32_0 = arith.constant 0 : i32
    %c0_i32_1 = arith.constant 0 : i32
    %c0_i32_2 = arith.constant 0 : i32
    return %c0_i32, %c0_i32_0, %c0_i32_1 : i32, i32, i32
  }
}

</mosaic_0001>

<llo_original>
// kernel: tpu_custom_call.1
$region0: #{tpu_custom_call.1}
  #allocation0 [shape = 'u32[]', space=smem, size = 0x4, offset = 0x4, fixed_abs, tag = 'smem constant byte address 0x4 - core index']
  #allocation1 [shape = 'u32[144,128]{1,0:T(1,128)}', space=vmem, size = 0x12000, scoped, tag = 'internal scratch']
  %s0 = inlined_call_operand.hbm [shape: bf16[2,4,512], index: 0, kind: input, shape index: {}]
  %s1 = inlined_call_operand.vmem [shape: bf16[8,36], index: 1, kind: input, shape index: {}]
  %s2 = inlined_call_operand.vmem [shape: f32[8,1], index: 2, kind: input, shape index: {}]
  %s3 = inlined_call_operand.hbm [shape: f32[2,8,384], index: 3, kind: output, shape index: {}]
  %s4 = sld [smem:[#allocation0]]
  $region26: #{tpu_custom_call.1} parent=0
    _
  %s6 = ssub.s32 1, %s4
  %s7 = scalar_select 0, %s6, %s4
  $region1: #{tpu_custom_call.1} parent=0
    #allocation2 [shape = 'u8[8192]{0}', space=vmem, size = 0x2000, scoped, tag = 'input window, operand 0, single buffered']
    #allocation3 [shape = 's32[1]{0}', space=sflag, size = 0x4, scoped, tag = 'scoped memory for tpu_custom_call.1']
    #allocation4 [shape = 's32[1]{0}', space=sflag, size = 0x4, scoped, tag = 'scoped memory for tpu_custom_call.1']
    #allocation5 [shape = 'u8[24576]{0}', space=vmem, size = 0x6000, scoped, tag = 'output window, operand 0, single buffered']
    %8 = vsyncpa [#allocation3], 0
    %9 = vsyncpa [#allocation4], 0
    // Predicated region
    $region2: #{tpu_custom_call.1} parent=1 // pred_check
      _
    $region3: #{tpu_custom_call.1} parent=1 // pred_check_branch
      %11 = sbr.rel (0) target = $region5
    $region4: #{tpu_custom_call.1} parent=1 // pred_region
      %s13 = ssub.s32 256, 256
      %14 = vsyncadd [#allocation3], %s13
      %s15 = sshll.u32 [#allocation2], 4
      %s16 = int_to_ptr.vmem [resolvable:$true] %s15
      %21 = dma.hbm_to_vmem [thread:$0]  %s0, 256, %s16, [#allocation3], 128, 128, 8
    $region5: #{tpu_custom_call.1} parent=1 // pred_fallthru
      _
    // Predicated region
    $region6: #{tpu_custom_call.1} parent=1 // pred_check
      _
    $region7: #{tpu_custom_call.1} parent=1 // pred_check_branch
      %23 = sbr.rel (0) target = $region9
    $region8: #{tpu_custom_call.1} parent=1 // pred_region
      _
    $region9: #{tpu_custom_call.1} parent=1 // pred_fallthru
      _
    // Predicated region
    $region10: #{tpu_custom_call.1} parent=1 // pred_check
      _
    $region11: #{tpu_custom_call.1} parent=1 // pred_check_branch
      %25 = sbr.rel (0) target = $region13
    $region12: #{tpu_custom_call.1} parent=1 // pred_region
      _
    $region13: #{tpu_custom_call.1} parent=1 // pred_fallthru
      _
    // Predicated region
    $region14: #{tpu_custom_call.1} parent=1 // pred_check
      _
    $region15: #{tpu_custom_call.1} parent=1 // pred_check_branch
      %27 = sbr.rel (0) target = $region17
    $region16: #{tpu_custom_call.1} parent=1 // pred_region
      %28 = dma.done [#allocation3], 256
    $region17: #{tpu_custom_call.1} parent=1 // pred_fallthru
      _
    %v30 = vld [vmem:[#allocation2] sm:$0x3f]
    %v31 = vld [vmem:[#allocation2] sm:$0xff]
    %v33 = vcombine.high %v30, %v30
    %v35 = vunpack.c.l.s4 1983009808
    %v36 = vunpack.c.0.s8 %v35
    %v37 = vlaneseq
    %v38 = vshrl.u32 %v37, 7
    %v39 = vsub.s32 %v36, %v38
    %v40 = vrot.slane %v30, %v39
    %v42 = vunpack.c.l.s4 1983009808
    %v43 = vunpack.c.0.s8 %v42
    %v44 = vlaneseq
    %v45 = vshrl.u32 %v44, 7
    %v46 = vsub.s32 %v43, %v45
    %v47 = vrot.slane %v33, %v46
    %v48 = vcombine.high %v40, %v40
    %v50 = vcombine.low %v31, %v31
    %v52 = vunpack.c.l.s4 1983009808
    %v53 = vunpack.c.0.s8 %v52
    %v54 = vlaneseq
    %v55 = vshrl.u32 %v54, 7
    %v56 = vsub.s32 %v53, %v55
    %v57 = vrot.slane %v50, %v56
    %v59 = vunpack.c.l.s4 1983009808
    %v60 = vunpack.c.0.s8 %v59
    %v61 = vlaneseq
    %v62 = vshrl.u32 %v61, 7
    %v63 = vsub.s32 %v60, %v62
    %v64 = vrot.slane %v31, %v63
    %v65 = vcombine.high %v57, %v57
    %v66 = vcombine.high %v64, %v64
    %67 = vrot.lane.b32.xlu0 %v57, 127
    %v68 = vpop.permute.xlu0 %67
    %69 = vrot.lane.b32.xlu0 %v65, 127
    %v70 = vpop.permute.xlu0 %69
    %71 = vrot.lane.b32.xlu0 %v64, 127
    %v72 = vpop.permute.xlu0 %71
    %73 = vrot.lane.b32.xlu0 %v66, 127
    %v74 = vpop.permute.xlu0 %73
    %vm75 = vcmask 1039360
    %v76 = vsel %vm75, %v68, %v70
    %v77 = vsel %vm75, %v70, %v72
    %v78 = vsel %vm75, %v72, %v74
    %v79 = vcombine.high %v31, %v31
    %v81 = vunpack.c.l.s4 1983009808
    %v82 = vunpack.c.0.s8 %v81
    %v83 = vlaneseq
    %v84 = vshrl.u32 %v83, 7
    %v85 = vsub.s32 %v82, %v84
    %v86 = vrot.slane %v79, %v85
    %v87 = vcombine.low %v64, %v64
    %v88 = vcombine.low %v86, %v86
    %89 = vrot.lane.b32.xlu0 %v87, 126
    %v90 = vpop.permute.xlu0 %89
    %91 = vrot.lane.b32.xlu0 %v64, 126
    %v92 = vpop.permute.xlu0 %91
    %93 = vrot.lane.b32.xlu0 %v88, 126
    %v94 = vpop.permute.xlu0 %93
    %95 = vrot.lane.b32.xlu0 %v86, 126
    %v96 = vpop.permute.xlu0 %95
    %vm97 = vcmask 1031168
    %v98 = vsel %vm97, %v90, %v92
    %v99 = vsel %vm97, %v92, %v94
    %v100 = vsel %vm97, %v94, %v96
    %v101 = vcombine.low %v57, %v57
    %102 = vrot.lane.b32.xlu0 %v101, 110
    %v103 = vpop.permute.xlu0 %102
    %104 = vrot.lane.b32.xlu0 %v57, 110
    %v105 = vpop.permute.xlu0 %104
    %106 = vrot.lane.b32.xlu0 %v87, 110
    %v107 = vpop.permute.xlu0 %106
    %108 = vrot.lane.b32.xlu0 %v64, 110
    %v109 = vpop.permute.xlu0 %108
    %vm110 = vcmask 900096
    %v111 = vsel %vm110, %v103, %v105
    %v112 = vsel %vm110, %v105, %v107
    %v113 = vsel %vm110, %v107, %v109
    %v114 = vcombine.high %v86, %v86
    %115 = vrot.lane.b32.xlu0 %v64, 109
    %v116 = vpop.permute.xlu0 %115
    %117 = vrot.lane.b32.xlu0 %v66, 109
    %v118 = vpop.permute.xlu0 %117
    %119 = vrot.lane.b32.xlu0 %v86, 109
    %v120 = vpop.permute.xlu0 %119
    %121 = vrot.lane.b32.xlu0 %v114, 109
    %v122 = vpop.permute.xlu0 %121
    %vm123 = vcmask 891904
    %v124 = vsel %vm123, %v116, %v118
    %v125 = vsel %vm123, %v118, %v120
    %v126 = vsel %vm123, %v120, %v122
    %127 = vrot.lane.b32.xlu0 %v57, 108
    %v128 = vpop.permute.xlu0 %127
    %129 = vrot.lane.b32.xlu0 %v65, 108
    %v130 = vpop.permute.xlu0 %129
    %131 = vrot.lane.b32.xlu0 %v64, 108
    %v132 = vpop.permute.xlu0 %131
    %133 = vrot.lane.b32.xlu0 %v66, 108
    %v134 = vpop.permute.xlu0 %133
    %vm135 = vcmask 883712
    %v136 = vsel %vm135, %v128, %v130
    %v137 = vsel %vm135, %v130, %v132
    %v138 = vsel %vm135, %v132, %v134
    %139 = vrot.lane.b32.xlu0 %v87, 92
    %v140 = vpop.permute.xlu0 %139
    %141 = vrot.lane.b32.xlu0 %v64, 92
    %v142 = vpop.permute.xlu0 %141
    %143 = vrot.lane.b32.xlu0 %v88, 92
    %v144 = vpop.permute.xlu0 %143
    %145 = vrot.lane.b32.xlu0 %v86, 92
    %v146 = vpop.permute.xlu0 %145
    %vm147 = vcmask 752640
    %v148 = vsel %vm147, %v140, %v142
    %v149 = vsel %vm147, %v142, %v144
    %v150 = vsel %vm147, %v144, %v146
    %151 = vrot.lane.b32.xlu0 %v101, 91
    %v152 = vpop.permute.xlu0 %151
    %153 = vrot.lane.b32.xlu0 %v57, 91
    %v154 = vpop.permute.xlu0 %153
    %155 = vrot.lane.b32.xlu0 %v87, 91
    %v156 = vpop.permute.xlu0 %155
    %157 = vrot.lane.b32.xlu0 %v64, 91
    %v158 = vpop.permute.xlu0 %157
    %vm159 = vcmask 744448
    %v160 = vsel %vm159, %v152, %v154
    %v161 = vsel %vm159, %v154, %v156
    %v162 = vsel %vm159, %v156, %v158
    %163 = vrot.lane.b32.xlu0 %v64, 90
    %v164 = vpop.permute.xlu0 %163
    %165 = vrot.lane.b32.xlu0 %v66, 90
    %v166 = vpop.permute.xlu0 %165
    %167 = vrot.lane.b32.xlu0 %v86, 90
    %v168 = vpop.permute.xlu0 %167
    %169 = vrot.lane.b32.xlu0 %v114, 90
    %v170 = vpop.permute.xlu0 %169
    %vm171 = vcmask 736256
    %v172 = vsel %vm171, %v164, %v166
    %v173 = vsel %vm171, %v166, %v168
    %v174 = vsel %vm171, %v168, %v170
    %vm175 = vcmask 1041408
    %v178 = vsel %vm175, %v40, %v76
    %v181 = vsel %vm175, %v48, %v77
    %v184 = vsel %vm175, %v47, %v78
    %vm185 = vcmask 1043456
    %v187 = vsel %vm185, %v178, %v98
    %v189 = vsel %vm185, %v181, %v99
    %v191 = vsel %vm185, %v184, %v100
    %vm192 = vcmask 1045504
    %v194 = vsel %vm192, %v187, %v111
    %v197 = vsel %vm192, %v189, %v112
    %v200 = vsel %vm192, %v191, %v113
    %v204 = vsel %vm175, %v124, %v136
    %v207 = vsel %vm175, %v125, %v137
    %v210 = vsel %vm175, %v126, %v138
    %v212 = vsel %vm185, %v204, %v148
    %v214 = vsel %vm185, %v207, %v149
    %v216 = vsel %vm185, %v210, %v150
    %v218 = vsel %vm192, %v212, %v160
    %v221 = vsel %vm192, %v214, %v161
    %v224 = vsel %vm192, %v216, %v162
    %s226 = scalar_lea.vmem [#allocation2], 8
    %v227 = vld [vmem:[%s226] sm:$0x3f]
    %v228 = vld [vmem:[%s226] sm:$0xff]
    %v230 = vcombine.high %v227, %v227
    %v232 = vunpack.c.l.s4 1983009808
    %v233 = vunpack.c.0.s8 %v232
    %v234 = vlaneseq
    %v235 = vshrl.u32 %v234, 7
    %v236 = vsub.s32 %v233, %v235
    %v237 = vrot.slane %v227, %v236
    %v239 = vunpack.c.l.s4 1983009808
    %v240 = vunpack.c.0.s8 %v239
    %v241 = vlaneseq
    %v242 = vshrl.u32 %v241, 7
    %v243 = vsub.s32 %v240, %v242
    %v244 = vrot.slane %v230, %v243
    %v245 = vcombine.high %v237, %v237
    %v247 = vcombine.low %v228, %v228
    %v249 = vunpack.c.l.s4 1983009808
    %v250 = vunpack.c.0.s8 %v249
    %v251 = vlaneseq
    %v252 = vshrl.u32 %v251, 7
    %v253 = vsub.s32 %v250, %v252
    %v254 = vrot.slane %v247, %v253
    %v256 = vunpack.c.l.s4 1983009808
    %v257 = vunpack.c.0.s8 %v256
    %v258 = vlaneseq
    %v259 = vshrl.u32 %v258, 7
    %v260 = vsub.s32 %v257, %v259
    %v261 = vrot.slane %v228, %v260
    %v262 = vcombine.high %v254, %v254
    %v263 = vcombine.high %v261, %v261
    %264 = vrot.lane.b32.xlu0 %v254, 127
    %v265 = vpop.permute.xlu0 %264
    %266 = vrot.lane.b32.xlu0 %v262, 127
    %v267 = vpop.permute.xlu0 %266
    %268 = vrot.lane.b32.xlu0 %v261, 127
    %v269 = vpop.permute.xlu0 %268
    %270 = vrot.lane.b32.xlu0 %v263, 127
    %v271 = vpop.permute.xlu0 %270
    %v272 = vsel %vm75, %v265, %v267
    %v273 = vsel %vm75, %v267, %v269
    %v274 = vsel %vm75, %v269, %v271
    %v275 = vcombine.high %v228, %v228
    %v277 = vunpack.c.l.s4 1983009808
    %v278 = vunpack.c.0.s8 %v277
    %v279 = vlaneseq
    %v280 = vshrl.u32 %v279, 7
    %v281 = vsub.s32 %v278, %v280
    %v282 = vrot.slane %v275, %v281
    %v283 = vcombine.low %v261, %v261
    %v284 = vcombine.low %v282, %v282
    %285 = vrot.lane.b32.xlu0 %v283, 126
    %v286 = vpop.permute.xlu0 %285
    %287 = vrot.lane.b32.xlu0 %v261, 126
    %v288 = vpop.permute.xlu0 %287
    %289 = vrot.lane.b32.xlu0 %v284, 126
    %v290 = vpop.permute.xlu0 %289
    %291 = vrot.lane.b32.xlu0 %v282, 126
    %v292 = vpop.permute.xlu0 %291
    %v293 = vsel %vm97, %v286, %v288
    %v294 = vsel %vm97, %v288, %v290
    %v295 = vsel %vm97, %v290, %v292
    %v296 = vcombine.low %v254, %v254
    %297 = vrot.lane.b32.xlu0 %v296, 110
    %v298 = vpop.permute.xlu0 %297
    %299 = vrot.lane.b32.xlu0 %v254, 110
    %v300 = vpop.permute.xlu0 %299
    %301 = vrot.lane.b32.xlu0 %v283, 110
    %v302 = vpop.permute.xlu0 %301
    %303 = vrot.lane.b32.xlu0 %v261, 110
    %v304 = vpop.permute.xlu0 %303
    %v305 = vsel %vm110, %v298, %v300
    %v306 = vsel %vm110, %v300, %v302
    %v307 = vsel %vm110, %v302, %v304
    %v308 = vcombine.high %v282, %v282
    %309 = vrot.lane.b32.xlu0 %v261, 109
    %v310 = vpop.permute.xlu0 %309
    %311 = vrot.lane.b32.xlu0 %v263, 109
    %v312 = vpop.permute.xlu0 %311
    %313 = vrot.lane.b32.xlu0 %v282, 109
    %v314 = vpop.permute.xlu0 %313
    %315 = vrot.lane.b32.xlu0 %v308, 109
    %v316 = vpop.permute.xlu0 %315
    %v317 = vsel %vm123, %v310, %v312
    %v318 = vsel %vm123, %v312, %v314
    %v319 = vsel %vm123, %v314, %v316
    %320 = vrot.lane.b32.xlu0 %v254, 108
    %v321 = vpop.permute.xlu0 %320
    %322 = vrot.lane.b32.xlu0 %v262, 108
    %v323 = vpop.permute.xlu0 %322
    %324 = vrot.lane.b32.xlu0 %v261, 108
    %v325 = vpop.permute.xlu0 %324
    %326 = vrot.lane.b32.xlu0 %v263, 108
    %v327 = vpop.permute.xlu0 %326
    %v328 = vsel %vm135, %v321, %v323
    %v329 = vsel %vm135, %v323, %v325
    %v330 = vsel %vm135, %v325, %v327
    %331 = vrot.lane.b32.xlu0 %v283, 92
    %v332 = vpop.permute.xlu0 %331
    %333 = vrot.lane.b32.xlu0 %v261, 92
    %v334 = vpop.permute.xlu0 %333
    %335 = vrot.lane.b32.xlu0 %v284, 92
    %v336 = vpop.permute.xlu0 %335
    %337 = vrot.lane.b32.xlu0 %v282, 92
    %v338 = vpop.permute.xlu0 %337
    %v339 = vsel %vm147, %v332, %v334
    %v340 = vsel %vm147, %v334, %v336
    %v341 = vsel %vm147, %v336, %v338
    %342 = vrot.lane.b32.xlu0 %v296, 91
    %v343 = vpop.permute.xlu0 %342
    %344 = vrot.lane.b32.xlu0 %v254, 91
    %v345 = vpop.permute.xlu0 %344
    %346 = vrot.lane.b32.xlu0 %v283, 91
    %v347 = vpop.permute.xlu0 %346
    %348 = vrot.lane.b32.xlu0 %v261, 91
    %v349 = vpop.permute.xlu0 %348
    %v350 = vsel %vm159, %v343, %v345
    %v351 = vsel %vm159, %v345, %v347
    %v352 = vsel %vm159, %v347, %v349
    %353 = vrot.lane.b32.xlu0 %v261, 90
    %v354 = vpop.permute.xlu0 %353
    %355 = vrot.lane.b32.xlu0 %v263, 90
    %v356 = vpop.permute.xlu0 %355
    %357 = vrot.lane.b32.xlu0 %v282, 90
    %v358 = vpop.permute.xlu0 %357
    %359 = vrot.lane.b32.xlu0 %v308, 90
    %v360 = vpop.permute.xlu0 %359
    %v361 = vsel %vm171, %v354, %v356
    %v362 = vsel %vm171, %v356, %v358
    %v363 = vsel %vm171, %v358, %v360
    %v366 = vsel %vm175, %v237, %v272
    %v369 = vsel %vm175, %v245, %v273
    %v372 = vsel %vm175, %v244, %v274
    %v374 = vsel %vm185, %v366, %v293
    %v376 = vsel %vm185, %v369, %v294
    %v378 = vsel %vm185, %v372, %v295
    %v380 = vsel %vm192, %v374, %v305
    %v383 = vsel %vm192, %v376, %v306
    %v386 = vsel %vm192, %v378, %v307
    %v390 = vsel %vm175, %v317, %v328
    %v393 = vsel %vm175, %v318, %v329
    %v396 = vsel %vm175, %v319, %v330
    %v398 = vsel %vm185, %v390, %v339
    %v400 = vsel %vm185, %v393, %v340
    %v402 = vsel %vm185, %v396, %v341
    %v404 = vsel %vm192, %v398, %v350
    %v407 = vsel %vm192, %v400, %v351
    %v410 = vsel %vm192, %v402, %v352
    %v412 = vld [vmem:[%s1] sm:$0xf]
    %v413 = vld [vmem:[%s2] sm:$0xff]
    %415 = vset.pattern.permute.xlu0 0
    %416 = vperm.xlu0 %415, %v413
    %v417 = vpop.permute.xlu0 %416
    %vm419 = vcmask 293888
    %v421 = vsel %vm419, %v412, 0
    %v424 = vsel %vm175, %v172, 0
    %v427 = vsel %vm175, %v173, 0
    %v430 = vsel %vm175, %v174, 0
    %v433 = vsel %vm175, %v361, 0
    %v436 = vsel %vm175, %v362, 0
    %v439 = vsel %vm175, %v363, 0
    %441 = vmatprep.subr.bf16.mxu0 %v197
    %442 = vmatpush1.bf16.msra.mxu0 %v194
    %443 = vmatprep.subr.bf16.mxu0 %v221
    %444 = vmatpush1.bf16.msra.mxu0 %v218
    %445 = vmatprep.subr.bf16.mxu0 %v427
    %446 = vmatpush1.bf16.msra.mxu0 %v424
    %447 = vmatprep.subr.bf16.mxu0 0
    %448 = vmatpush1.bf16.msra.mxu0 0
    %449 = vmatprep.subr.bf16.mxu0 0
    %450 = vmatpush1.bf16.msra.mxu0 0
    %451 = vmatprep.subr.bf16.mxu0 0
    %452 = vmatpush1.bf16.msra.mxu0 0
    %453 = vmatprep.subr.bf16.mxu0 0
    %454 = vmatpush1.bf16.msra.mxu0 0
    %455 = vmatprep.subr.bf16.mxu0 0
    %456 = vmatpush1.bf16.msra.mxu0 0
    %457 = vmatprep.subr.bf16.mxu0 0
    %458 = vmatpush1.bf16.msra.mxu0 0
    %459 = vmatprep.subr.bf16.mxu0 0
    %460 = vmatpush1.bf16.msra.mxu0 0
    %461 = vmatprep.subr.bf16.mxu0 0
    %462 = vmatpush1.bf16.msra.mxu0 0
    %463 = vmatprep.subr.bf16.mxu0 0
    %464 = vmatpush1.bf16.msra.mxu0 0
    %465 = vmatprep.subr.bf16.mxu0 0
    %466 = vmatpush1.bf16.msra.mxu0 0
    %467 = vmatprep.subr.bf16.mxu0 0
    %468 = vmatpush1.bf16.msra.mxu0 0
    %469 = vmatprep.subr.bf16.mxu0 0
    %470 = vmatpush1.bf16.msra.mxu0 0
    %471 = vmatprep.subr.bf16.mxu0 0
    %472 = vmatpush1.bf16.msra.mxu0 0
    %473 = vmatprep.mubr.bf16.mxu0 0
    %474 = vmatmul.mubr.bf16.gmra.mrb[0].mxu0 %v421
    %v475 = vpop.f32.mrb[0].mxu0
    %v476 = vadd.f32 %v417, %v475
    %v477 = vpop.f32.mrb[0].mxu0
    %v478 = vadd.f32 %v417, %v477
    %v479 = vpop.f32.mrb[0].mxu0
    %v480 = vpop.f32.mrb[0].mxu0
    %481 = vdwg.mxu0
    %482 = vmatprep.subr.bf16.mxu0 %v380
    %483 = vmatpush1.bf16.msra.mxu0 %v200
    %484 = vmatprep.subr.bf16.mxu0 %v404
    %485 = vmatpush1.bf16.msra.mxu0 %v224
    %486 = vmatprep.subr.bf16.mxu0 %v433
    %487 = vmatpush1.bf16.msra.mxu0 %v430
    %488 = vmatprep.subr.bf16.mxu0 0
    %489 = vmatpush1.bf16.msra.mxu0 0
    %490 = vmatprep.subr.bf16.mxu0 0
    %491 = vmatpush1.bf16.msra.mxu0 0
    %492 = vmatprep.subr.bf16.mxu0 0
    %493 = vmatpush1.bf16.msra.mxu0 0
    %494 = vmatprep.subr.bf16.mxu0 0
    %495 = vmatpush1.bf16.msra.mxu0 0
    %496 = vmatprep.subr.bf16.mxu0 0
    %497 = vmatpush1.bf16.msra.mxu0 0
    %498 = vmatprep.subr.bf16.mxu0 0
    %499 = vmatpush1.bf16.msra.mxu0 0
    %500 = vmatprep.subr.bf16.mxu0 0
    %501 = vmatpush1.bf16.msra.mxu0 0
    %502 = vmatprep.subr.bf16.mxu0 0
    %503 = vmatpush1.bf16.msra.mxu0 0
    %504 = vmatprep.subr.bf16.mxu0 0
    %505 = vmatpush1.bf16.msra.mxu0 0
    %506 = vmatprep.subr.bf16.mxu0 0
    %507 = vmatpush1.bf16.msra.mxu0 0
    %508 = vmatprep.subr.bf16.mxu0 0
    %509 = vmatpush1.bf16.msra.mxu0 0
    %510 = vmatprep.subr.bf16.mxu0 0
    %511 = vmatpush1.bf16.msra.mxu0 0
    %512 = vmatprep.subr.bf16.mxu0 0
    %513 = vmatpush1.bf16.msra.mxu0 0
    %514 = vmatprep.mubr.bf16.mxu0 0
    %515 = vmatmul.mubr.bf16.gmra.mrb[0].mxu0 %v421
    %v516 = vpop.f32.mrb[0].mxu0
    %v517 = vadd.f32 %v417, %v516
    %v518 = vpop.f32.mrb[0].mxu0
    %v519 = vadd.f32 %v417, %v518
    %v520 = vpop.f32.mrb[0].mxu0
    %v521 = vpop.f32.mrb[0].mxu0
    %522 = vdwg.mxu0
    %523 = vmatprep.subr.bf16.mxu0 %v386
    %524 = vmatpush1.bf16.msra.mxu0 %v383
    %525 = vmatprep.subr.bf16.mxu0 %v410
    %526 = vmatpush1.bf16.msra.mxu0 %v407
    %527 = vmatprep.subr.bf16.mxu0 %v439
    %528 = vmatpush1.bf16.msra.mxu0 %v436
    %529 = vmatprep.subr.bf16.mxu0 0
    %530 = vmatpush1.bf16.msra.mxu0 0
    %531 = vmatprep.subr.bf16.mxu0 0
    %532 = vmatpush1.bf16.msra.mxu0 0
    %533 = vmatprep.subr.bf16.mxu0 0
    %534 = vmatpush1.bf16.msra.mxu0 0
    %535 = vmatprep.subr.bf16.mxu0 0
    %536 = vmatpush1.bf16.msra.mxu0 0
    %537 = vmatprep.subr.bf16.mxu0 0
    %538 = vmatpush1.bf16.msra.mxu0 0
    %539 = vmatprep.subr.bf16.mxu0 0
    %540 = vmatpush1.bf16.msra.mxu0 0
    %541 = vmatprep.subr.bf16.mxu0 0
    %542 = vmatpush1.bf16.msra.mxu0 0
    %543 = vmatprep.subr.bf16.mxu0 0
    %544 = vmatpush1.bf16.msra.mxu0 0
    %545 = vmatprep.subr.bf16.mxu0 0
    %546 = vmatpush1.bf16.msra.mxu0 0
    %547 = vmatprep.subr.bf16.mxu0 0
    %548 = vmatpush1.bf16.msra.mxu0 0
    %549 = vmatprep.subr.bf16.mxu0 0
    %550 = vmatpush1.bf16.msra.mxu0 0
    %551 = vmatprep.subr.bf16.mxu0 0
    %552 = vmatpush1.bf16.msra.mxu0 0
    %553 = vmatprep.subr.bf16.mxu0 0
    %554 = vmatpush1.bf16.msra.mxu0 0
    %555 = vmatprep.mubr.bf16.mxu0 0
    %556 = vmatmul.mubr.bf16.gmra.mrb[0].mxu0 %v421
    %v557 = vpop.f32.mrb[0].mxu0
    %v558 = vadd.f32 %v417, %v557
    %v559 = vpop.f32.mrb[0].mxu0
    %v560 = vadd.f32 %v417, %v559
    %v561 = vpop.f32.mrb[0].mxu0
    %v562 = vpop.f32.mrb[0].mxu0
    %563 = vdwg.mxu0
    %v564 = vmin.f32 %v476, 20.0
    %v565 = vmin.f32 %v478, 20.0
    %v566 = vmin.f32 %v517, 20.0
    %v567 = vmin.f32 %v519, 20.0
    %v568 = vmin.f32 %v558, 20.0
    %v569 = vmin.f32 %v560, 20.0
    %v570 = vmul.f32 %v564, 1.442695
    %v571 = vpow.pop %v570
    %v572 = vmul.f32 %v565, 1.442695
    %v573 = vpow.pop %v572
    %v574 = vmul.f32 %v566, 1.442695
    %v575 = vpow.pop %v574
    %v576 = vmul.f32 %v567, 1.442695
    %v577 = vpow.pop %v576
    %v578 = vmul.f32 %v568, 1.442695
    %v579 = vpow.pop %v578
    %v580 = vmul.f32 %v569, 1.442695
    %v581 = vpow.pop %v580
    %v582 = vadd.f32 %v571, 2.0
    %v583 = vadd.f32 %v573, 2.0
    %v584 = vadd.f32 %v575, 2.0
    %v585 = vadd.f32 %v577, 2.0
    %v586 = vadd.f32 %v579, 2.0
    %v587 = vadd.f32 %v581, 2.0
    %v588 = vmul.f32 %v571, %v582
    %v589 = vmul.f32 %v573, %v583
    %v590 = vmul.f32 %v575, %v584
    %v591 = vmul.f32 %v577, %v585
    %v592 = vmul.f32 %v579, %v586
    %v593 = vmul.f32 %v581, %v587
    %v594 = vadd.f32 %v588, 2.0
    %v595 = vadd.f32 %v589, 2.0
    %v596 = vadd.f32 %v590, 2.0
    %v597 = vadd.f32 %v591, 2.0
    %v598 = vadd.f32 %v592, 2.0
    %v599 = vadd.f32 %v593, 2.0
    %v600 = vrcp.pop %v594
    %v601 = vrcp.pop %v595
    %v602 = vrcp.pop %v596
    %v603 = vrcp.pop %v597
    %v604 = vrcp.pop %v598
    %v605 = vrcp.pop %v599
    %v606 = vmul.f32 %v588, %v600
    %v607 = vmul.f32 %v589, %v601
    %v608 = vmul.f32 %v590, %v602
    %v609 = vmul.f32 %v591, %v603
    %v610 = vmul.f32 %v592, %v604
    %v611 = vmul.f32 %v593, %v605
    %vm612 = vcmp.gt.f32.partialorder %v476, 20.0
    %vm613 = vcmp.gt.f32.partialorder %v478, 20.0
    %vm614 = vcmp.gt.f32.partialorder %v517, 20.0
    %vm615 = vcmp.gt.f32.partialorder %v519, 20.0
    %vm616 = vcmp.gt.f32.partialorder %v558, 20.0
    %vm617 = vcmp.gt.f32.partialorder %v560, 20.0
    %v618 = vsel %vm612, 1.0, %v606
    %v619 = vsel %vm613, 1.0, %v607
    %v620 = vsel %vm614, 1.0, %v608
    %v621 = vsel %vm615, 1.0, %v609
    %v622 = vsel %vm616, 1.0, %v610
    %v623 = vsel %vm617, 1.0, %v611
    %v624 = vmul.f32 %v476, %v618
    %v625 = vmul.f32 %v478, %v619
    %v626 = vmul.f32 %v517, %v620
    %v627 = vmul.f32 %v519, %v621
    %v628 = vmul.f32 %v558, %v622
    %v629 = vmul.f32 %v560, %v623
    %630 = vst [vmem:[#allocation5] sm:$0xff] %v624
    %631 = vst [vmem:[#allocation5 + $0x8] sm:$0xff] %v625
    %632 = vst [vmem:[#allocation5 + $0x10] sm:$0xff] %v626
    %s633 = scalar_lea.vmem [#allocation5], 24
    %634 = vst [vmem:[%s633] sm:$0xff] %v627
    %635 = vst [vmem:[%s633 + $0x8] sm:$0xff] %v628
    %636 = vst [vmem:[%s633 + $0x10] sm:$0xff] %v629
    // Predicated region
    $region18: #{tpu_custom_call.1} parent=1 // pred_check
      _
    $region19: #{tpu_custom_call.1} parent=1 // pred_check_branch
      %638 = sbr.rel (0) target = $region21
    $region20: #{tpu_custom_call.1} parent=1 // pred_region
      %s640 = ssub.s32 768, 768
      %641 = vsyncadd [#allocation4], %s640
      %s642 = sshll.u32 [#allocation5], 4
      %s643 = int_to_ptr.vmem [resolvable:$true] %s642
      %648 = dma.vmem_to_hbm [thread:$0]  %s643, 768, %s3, [#allocation4], 384, 384, 24
    $region21: #{tpu_custom_call.1} parent=1 // pred_fallthru
      _
    // Predicated region
    $region22: #{tpu_custom_call.1} parent=1 // pred_check
      _
    $region23: #{tpu_custom_call.1} parent=1 // pred_check_branch
      %650 = sbr.rel (0) target = $region25
    $region24: #{tpu_custom_call.1} parent=1 // pred_region
      %651 = dma.done [#allocation4], 768
    $region25: #{tpu_custom_call.1} parent=1 // pred_fallthru
      _
    %652 = vsyncpa [#allocation3], 1
    %653 = vsyncpa [#allocation4], 1

</llo_original>
